<compile_context>
chip_gen: v5e
topology: v5e:2x2
jax: 0.10.0
libtpu: 0.0.40
codegen_flags: <defaults>
</compile_context>

<pallas_src>
import functools

import jax
import jax.numpy as jnp
from jax.experimental import pallas as pl
from jax.experimental.pallas import tpu as pltpu

BN_EPS = 1e-5
# MXU operand dtype (accumulation is always f32).  Flip to jnp.float32 if
# bit-accuracy against the f32 PyTorch reference is required.
MXU_DTYPE = jnp.bfloat16
_PARALLEL = pltpu.CompilerParams(dimension_semantics=("parallel",))


# ------------------------------ host helpers ------------------------------- #

def _sel_matrix(n_in, n_out, stride, offset=0):
    """S[w_in, w_out] = 1 iff w_in == stride * w_out + offset."""
    wi = jnp.arange(n_in)[:, None]
    wo = jnp.arange(n_out)[None, :]
    return (wi == stride * wo + offset).astype(jnp.float32)


def _inv_counts_flat(H, W, C, K, stride, pad, Ho, Wo):
    """(Ho, Wo*C) reciprocal of the valid-element count per output position
    (torch AvgPool2d with count_include_pad=False), channel-fastest layout."""
    def axis_counts(L, n):
        starts = jnp.arange(n) * stride - pad
        lo = jnp.clip(starts, 0, L)
        hi = jnp.clip(starts + K, 0, L)
        return (hi - lo).astype(jnp.float32)
    counts = axis_counts(H, Ho)[:, None] * axis_counts(W, Wo)[None, :]
    return jnp.repeat(1.0 / counts, C, axis=1)


def _bn_scale_shift(psum, psumsq, count, C, gamma, beta):
    """Finish training-mode BatchNorm statistics (biased variance) from flat
    per-image partial sums (N, 1, Wo*C) and fold gamma/beta into scale/shift."""
    s = jnp.sum(psum.reshape(psum.shape[0], -1, C), axis=(0, 1))
    ss = jnp.sum(psumsq.reshape(psumsq.shape[0], -1, C), axis=(0, 1))
    mean = s / count
    var = jnp.maximum(ss / count - mean * mean, 0.0)
    scale = gamma * jax.lax.rsqrt(var + BN_EPS)
    shift = beta - mean * scale
    return scale, shift


# ------------------------------ kernel helpers ------------------------------ #

def _fill_halo(xpad_ref, H, WC, padC, value):
    """Refill only the thin halo ring of the padded (Hp, WpC) scratch.  The
    interior is fully overwritten every grid step, so this is all the init the
    scratch needs; doing it per step (instead of once at program 0) stays
    correct when the batch axis is sharded across TensorCores (v7x megacore)."""
    Hp, WpC = xpad_ref.shape
    padR = (Hp - H) // 2
    xpad_ref[0:padR, :] = jnp.full((padR, WpC), value, jnp.float32)
    xpad_ref[padR + H:Hp, :] = jnp.full((Hp - padR - H, WpC), value, jnp.float32)
    xpad_ref[padR:padR + H, 0:padC] = jnp.full((H, padC), value, jnp.float32)
    xpad_ref[padR:padR + H, padC + WC:WpC] = (
        jnp.full((H, WpC - padC - WC), value, jnp.float32))


def _row_taps(xpad_ref, K, stride, Ho):
    """Yield (kh, rows): one (possibly H-strided) read of the padded scratch
    per kernel row; W offsets become contiguous lane slices of `rows`."""
    for kh in range(K):
        if stride == 1:
            yield kh, xpad_ref[kh:kh + Ho, :]
        else:
            yield kh, xpad_ref[pl.ds(kh, Ho, stride=stride), :]


# ------------------------------ Pallas kernels ------------------------------ #

def _sepconv_stage_kernel(x_ref, sc_ref, sh_ref, dw_ref, pw_ref,
                          y_ref, s_ref, ss_ref, xpad_ref,
                          *, K, pad, stride, C):
    """One SepConv stage on one image, lane-dense flat (H, W*C) layout:
         affine (previous BN; identity in stage 1) -> ReLU
         -> depthwise KxK conv (H stride folded into the row reads)
         -> 1x1 pointwise conv (+ stride-2 W decimation) as ONE bf16 MXU
            matmul against a kron(selection, pointwise) weight,
       plus per-image partial sums for the following BatchNorm."""
    H, WC = x_ref.shape[1], x_ref.shape[2]
    Ho = y_ref.shape[1]
    Wcols = pw_ref.shape[0] // C             # full-width depthwise output columns

    _fill_halo(xpad_ref, H, WC, pad * C, 0.0)     # zero halo == zero-pad of relu(x)
    xin = jnp.maximum(x_ref[0] * sc_ref[...] + sh_ref[...], 0.0)
    xpad_ref[pad:pad + H, pad * C:pad * C + WC] = xin

    # Depthwise KxK conv at full W width, f32 on the VPU (v5e has no bf16 VALU).
    # TODO(synk): tile this loop with lax.fori_loop(..., unroll=True) for K=5 at
    # lane-dense production channel counts to bound vreg live ranges.
    w = dw_ref[...]                               # (K, K, Wcols*C), host-pre-tiled
    acc = jnp.zeros((Ho, Wcols * C), jnp.float32)
    for kh, rows in _row_taps(xpad_ref, K, stride, Ho):
        for kw in range(K):
            acc = acc + rows[:, kw * C:kw * C + Wcols * C] * w[kh, kw]

    # Pointwise 1x1 conv + W decimation: one matmul, bf16 operands, f32 accum.
    y = jnp.dot(acc.astype(MXU_DTYPE), pw_ref[...],
                preferred_element_type=jnp.float32)        # (Ho, Wo*Cout)
    y_ref[0] = y
    s_ref[0] = jnp.sum(y, axis=0, keepdims=True)
    ss_ref[0] = jnp.sum(y * y, axis=0, keepdims=True)


def _pool_kernel(x_ref, *rest, K, pad, stride, C, kind):
    """KxK avg / max pool in the flat (H, W*C) layout.  Stride-2 W decimation
    is done with an exact 0/1 selection matmul (every output column selects
    exactly one input column, so it is exact in f32)."""
    i = 0
    sel_ref = None
    if stride > 1:
        sel_ref = rest[i]
        i += 1
    inv_ref = None
    if kind == "avg":
        inv_ref = rest[i]
        i += 1
    o_ref, xpad_ref = rest[i], rest[i + 1]

    H, WC = x_ref.shape[1], x_ref.shape[2]
    Ho = o_ref.shape[1]
    Wcols = xpad_ref.shape[1] // C - K + 1

    pad_val = 0.0 if kind == "avg" else -jnp.inf
    _fill_halo(xpad_ref, H, WC, pad * C, pad_val)
    xpad_ref[pad:pad + H, pad * C:pad * C + WC] = x_ref[0]

    if kind == "avg":
        acc = jnp.zeros((Ho, Wcols * C), jnp.float32)
        combine = lambda a, b: a + b
    else:
        acc = jnp.full((Ho, Wcols * C), -jnp.inf, jnp.float32)
        combine = jnp.maximum
    for _, rows in _row_taps(xpad_ref, K, stride, Ho):
        for kw in range(K):
            acc = combine(acc, rows[:, kw * C:kw * C + Wcols * C])

    if stride > 1:
        acc = jnp.dot(acc, sel_ref[...], preferred_element_type=jnp.float32)
    if kind == "avg":
        acc = acc * inv_ref[...]                 # count_include_pad=False divisor
    o_ref[0] = acc


def _facred_kernel(x_ref, b0_ref, b1_ref, y_ref, s_ref, ss_ref):
    """FactorizedReduction: both stride-2 subsample paths are strided row reads
    of the full input; their 1x1 convs, the W decimation and the channel
    concatenation are folded into two kron matmuls.  Emits per-image partial
    sums for the following BatchNorm.  (Assumes even H, W, so path1's zero pad
    is never sampled by the stride-2 subsampling.)"""
    Ho = y_ref.shape[1]
    rows0 = x_ref[pl.ds(0, Ho, stride=2), :]     # even rows  (path0)
    rows1 = x_ref[pl.ds(1, Ho, stride=2), :]     # odd rows   (path1: pad + shift)
    y = (jnp.dot(rows0.astype(MXU_DTYPE), b0_ref[...],
                 preferred_element_type=jnp.float32)
         + jnp.dot(rows1.astype(MXU_DTYPE), b1_ref[...],
                   preferred_element_type=jnp.float32))    # (Ho, Wo*Cout)
    y_ref[0] = y
    s_ref[0] = jnp.sum(y, axis=0, keepdims=True)
    ss_ref[0] = jnp.sum(y * y, axis=0, keepdims=True)


def _affine_kernel(y_ref, sc_ref, sh_ref, o_ref):
    """Lane-dense y * scale + shift (final BatchNorm affine), written in place."""
    o_ref[...] = y_ref[...] * sc_ref[...] + sh_ref[...]


# ------------------------------ JAX wrappers -------------------------------- #

def _sepconv_stage(x_flat, H, W, C, scale_c, shift_c, dw, pw, K, pad, stride):
    """x_flat: (N, H, W*C).  Returns (y_flat (N, Ho, Wo*Cout), Ho, Wo, psum, psumsq)."""
    N = x_flat.shape[0]
    Cout = pw.shape[1]
    Hp, Wp = H + 2 * pad, W + 2 * pad
    Ho = (Hp - K) // stride + 1
    Wo = (Wp - K) // stride + 1
    Wcols = Wp - K + 1                       # full-width depthwise columns

    # pre-tile per-channel vectors onto the flat lane axis; fold the 1x1 conv
    # (and the stride-2 W decimation) into one kron weight for the MXU.
    sc = jnp.tile(scale_c, W).reshape(1, W * C)
    sh = jnp.tile(shift_c, W).reshape(1, W * C)
    dwt = jnp.tile(dw, (1, 1, Wcols))                          # (K, K, Wcols*C)
    pwk = jnp.kron(_sel_matrix(Wcols, Wo, stride), pw).astype(MXU_DTYPE)

    kern = functools.partial(_sepconv_stage_kernel, K=K, pad=pad, stride=stride, C=C)
    y, s, ss = pl.pallas_call(
        kern,
        out_shape=(jax.ShapeDtypeStruct((N, Ho, Wo * Cout), jnp.float32),
                   jax.ShapeDtypeStruct((N, 1, Wo * Cout), jnp.float32),
                   jax.ShapeDtypeStruct((N, 1, Wo * Cout), jnp.float32)),
        grid=(N,),
        in_specs=[pl.BlockSpec((1, H, W * C), lambda n: (n, 0, 0)),
                  pl.BlockSpec((1, W * C), lambda n: (0, 0)),
                  pl.BlockSpec((1, W * C), lambda n: (0, 0)),
                  pl.BlockSpec((K, K, Wcols * C), lambda n: (0, 0, 0)),
                  pl.BlockSpec((Wcols * C, Wo * Cout), lambda n: (0, 0))],
        out_specs=(pl.BlockSpec((1, Ho, Wo * Cout), lambda n: (n, 0, 0)),
                   pl.BlockSpec((1, 1, Wo * Cout), lambda n: (n, 0, 0)),
                   pl.BlockSpec((1, 1, Wo * Cout), lambda n: (n, 0, 0))),
        scratch_shapes=[pltpu.VMEM((Hp, Wp * C), jnp.float32)],
        compiler_params=_PARALLEL,
    )(x_flat, sc, sh, dwt, pwk)
    return y, Ho, Wo, s, ss


def _affine_apply_flat(y_flat, scale_c, shift_c, w_repeat):
    """Apply the final BN affine lane-dense on (N, Ho, Wo*C), in place."""
    N, Ho, WoC = y_flat.shape
    sc = jnp.tile(scale_c, w_repeat).reshape(1, 1, WoC)
    sh = jnp.tile(shift_c, w_repeat).reshape(1, 1, WoC)
    return pl.pallas_call(
        _affine_kernel,
        out_shape=jax.ShapeDtypeStruct((N, Ho, WoC), jnp.float32),
        grid=(N,),
        in_specs=[pl.BlockSpec((1, Ho, WoC), lambda n: (n, 0, 0)),
                  pl.BlockSpec((1, 1, WoC), lambda n: (0, 0, 0)),
                  pl.BlockSpec((1, 1, WoC), lambda n: (0, 0, 0))],
        out_specs=pl.BlockSpec((1, Ho, WoC), lambda n: (n, 0, 0)),
        input_output_aliases={0: 0},
        compiler_params=_PARALLEL,
    )(y_flat, sc, sh)


def _sepconv_forward(x_flat, N, H, W, C, p, K, pad, stride):
    # ReLU -> dw(K, stride) -> 1x1 -> BN -> ReLU -> dw(K, 1) -> 1x1 -> BN
    one = jnp.ones((C,), jnp.float32)
    zero = jnp.zeros((C,), jnp.float32)

    y1, H1, W1, s1, ss1 = _sepconv_stage(x_flat, H, W, C, one, zero,
                                         p["dw1"], p["pw1"], K, pad, stride)
    sc1, sh1 = _bn_scale_shift(s1, ss1, N * H1 * W1, C, p["g1"], p["b1"])

    # BN1 affine is fused into the second stage's kernel.
    y2, H2, W2, s2, ss2 = _sepconv_stage(y1, H1, W1, C, sc1, sh1,
                                         p["dw2"], p["pw2"], K, pad, 1)
    Cout = p["pw2"].shape[1]
    sc2, sh2 = _bn_scale_shift(s2, ss2, N * H2 * W2, Cout, p["g2"], p["b2"])

    y = _affine_apply_flat(y2, sc2, sh2, W2)
    return y, H2, W2, Cout


def _pool(x_flat, H, W, C, K, stride, pad, kind):
    N = x_flat.shape[0]
    Hp, Wp = H + 2 * pad, W + 2 * pad
    Ho = (Hp - K) // stride + 1
    Wo = (Wp - K) // stride + 1
    Wcols = Wp - K + 1

    args = [x_flat]
    in_specs = [pl.BlockSpec((1, H, W * C), lambda n: (n, 0, 0))]
    if stride > 1:
        sel = jnp.kron(_sel_matrix(Wcols, Wo, stride), jnp.eye(C, dtype=jnp.float32))
        args.append(sel)
        in_specs.append(pl.BlockSpec((Wcols * C, Wo * C), lambda n: (0, 0)))
    if kind == "avg":
        inv = _inv_counts_flat(H, W, C, K, stride, pad, Ho, Wo)
        args.append(inv)
        in_specs.append(pl.BlockSpec((Ho, Wo * C), lambda n: (0, 0)))

    kern = functools.partial(_pool_kernel, K=K, pad=pad, stride=stride, C=C, kind=kind)
    y = pl.pallas_call(
        kern,
        out_shape=jax.ShapeDtypeStruct((N, Ho, Wo * C), jnp.float32),
        grid=(N,),
        in_specs=in_specs,
        out_specs=pl.BlockSpec((1, Ho, Wo * C), lambda n: (n, 0, 0)),
        scratch_shapes=[pltpu.VMEM((Hp, Wp * C), jnp.float32)],
        compiler_params=_PARALLEL,
    )(*args)
    return y, Ho, Wo


def _factorized_reduction_forward(x_flat, N, H, W, C, p):
    half = p["w0"].shape[1]
    Cout = 2 * half
    Ho, Wo = H // 2, W // 2
    # kron weights: path selection (even / odd columns), 1x1 conv, and the
    # channel concat position are all folded into the matmul weights.
    w0p = jnp.concatenate([p["w0"], jnp.zeros((C, half), jnp.float32)], axis=1)
    w1p = jnp.concatenate([jnp.zeros((C, half), jnp.float32), p["w1"]], axis=1)
    b0 = jnp.kron(_sel_matrix(W, Wo, 2, 0), w0p).astype(MXU_DTYPE)
    b1 = jnp.kron(_sel_matrix(W, Wo, 2, 1), w1p).astype(MXU_DTYPE)

    y, s, ss = pl.pallas_call(
        _facred_kernel,
        out_shape=(jax.ShapeDtypeStruct((N, Ho, Wo * Cout), jnp.float32),
                   jax.ShapeDtypeStruct((N, 1, Wo * Cout), jnp.float32),
                   jax.ShapeDtypeStruct((N, 1, Wo * Cout), jnp.float32)),
        grid=(N,),
        in_specs=[pl.BlockSpec((None, H, W * C), lambda n: (n, 0, 0)),
                  pl.BlockSpec((W * C, Wo * Cout), lambda n: (0, 0)),
                  pl.BlockSpec((W * C, Wo * Cout), lambda n: (0, 0))],
        out_specs=(pl.BlockSpec((1, Ho, Wo * Cout), lambda n: (n, 0, 0)),
                   pl.BlockSpec((1, 1, Wo * Cout), lambda n: (n, 0, 0)),
                   pl.BlockSpec((1, 1, Wo * Cout), lambda n: (n, 0, 0))),
        compiler_params=_PARALLEL,
    )(x_flat, b0, b1)

    sc, sh = _bn_scale_shift(s, ss, N * Ho * Wo, Cout, p["g"], p["b"])
    y = _affine_apply_flat(y, sc, sh, Wo)
    return y, Ho, Wo, Cout


# ------------------------------- Operation ---------------------------------- #

class Operation:
    """JAX/Pallas port of the PyTorch Operation wrapper.

    op_idx: 0=SepConv3x3, 1=SepConv5x5, 2=AvgPool3x3, 3=MaxPool3x3, 4=Identity
    (Identity with stride>1 becomes a FactorizedReduction.)
    Fresh module => BatchNorm in training mode (batch stats, biased variance,
    gamma=1, beta=0); conv weights are random (deterministic PRNG).
    """

    def __init__(self, op_idx, input_size, out_channels, stride, key=None):
        self.op_idx = op_idx
        self.input_size = list(input_size)          # CHW
        self.out_channels = out_channels
        self.stride = stride
        C, H, W = input_size
        if key is None:
            key = jax.random.PRNGKey(0)
        scale = 0.1

        if op_idx in (0, 1):
            self.K = 3 if op_idx == 0 else 5
            self.pad = 1 if op_idx == 0 else 2
            k = jax.random.split(key, 4)
            self.params = dict(
                dw1=scale * jax.random.normal(k[0], (self.K, self.K, C), jnp.float32),
                pw1=scale * jax.random.normal(k[1], (C, C), jnp.float32),
                g1=jnp.ones((C,), jnp.float32),
                b1=jnp.zeros((C,), jnp.float32),
                dw2=scale * jax.random.normal(k[2], (self.K, self.K, C), jnp.float32),
                pw2=scale * jax.random.normal(k[3], (C, out_channels), jnp.float32),
                g2=jnp.ones((out_channels,), jnp.float32),
                b2=jnp.zeros((out_channels,), jnp.float32),
            )
            self.output_size = [out_channels, H // stride, W // stride]
        elif op_idx in (2, 3):
            self.params = {}
            self.output_size = [C, H // stride, W // stride]
        else:  # identity / factorized reduction
            if stride > 1:
                half = out_channels // 2
                k = jax.random.split(key, 2)
                self.params = dict(
                    w0=scale * jax.random.normal(k[0], (C, half), jnp.float32),
                    w1=scale * jax.random.normal(k[1], (C, half), jnp.float32),
                    g=jnp.ones((out_channels,), jnp.float32),
                    b=jnp.zeros((out_channels,), jnp.float32),
                )
                # (torch quirk: output_size uses input_size[1] for both dims)
                self.output_size = [out_channels, H // 2, H // 2]
            else:
                self.params = {}
                self.output_size = [C, H, W]

    def __call__(self, x_nchw):
        N, C, H, W = x_nchw.shape
        if self.op_idx == 4 and self.stride == 1:
            return x_nchw.astype(jnp.float32)       # identity pass-through
        # NCHW -> NHWC -> lane-dense flat (N, H, W*C); reversed at the end.
        # TODO(synk): keep the output NHWC/flat if the consumer allows, saving
        # the final transpose pass.
        x = jnp.transpose(x_nchw, (0, 2, 3, 1)).astype(jnp.float32)
        x_flat = x.reshape(N, H, W * C)
        if self.op_idx in (0, 1):
            y, Ho, Wo, Co = _sepconv_forward(x_flat, N, H, W, C, self.params,
                                             self.K, self.pad, self.stride)
        elif self.op_idx == 2:
            y, Ho, Wo = _pool(x_flat, H, W, C, 3, self.stride, 1, "avg")
            Co = C
        elif self.op_idx == 3:
            y, Ho, Wo = _pool(x_flat, H, W, C, 3, self.stride, 1, "max")
            Co = C
        else:
            y, Ho, Wo, Co = _factorized_reduction_forward(x_flat, N, H, W, C,
                                                          self.params)
        y = y.reshape(N, Ho, Wo, Co)
        return jnp.transpose(y, (0, 3, 1, 2))       # NHWC -> NCHW


# --------------------------------- main -------------------------------------- #

def _expected_shape(op_idx, N, C, H, W, out_channels, stride):
    if op_idx in (0, 1):
        return (N, out_channels, H // stride, W // stride)
    if op_idx in (2, 3):
        return (N, C, H // stride, W // stride)
    if stride > 1:
        return (N, out_channels, H // 2, W // 2)
    return (N, C, H, W)


if __name__ == "__main__":
    key = jax.random.PRNGKey(0)
    kx, kp = jax.random.split(key)
    N, C, H, W = 2, 4, 16, 16
    out_channels = 8
    x = jax.random.normal(kx, (N, C, H, W), jnp.float32)   # NCHW, like PyTorch

    for stride in (1, 2):
        for op_idx in range(5):
            op = Operation(op_idx, (C, H, W), out_channels, stride, key=kp)
            y = jax.block_until_ready(op(x))
            exp = _expected_shape(op_idx, N, C, H, W, out_channels, stride)
            assert y.shape == exp, (op_idx, stride, y.shape, exp)
            assert bool(jnp.all(jnp.isfinite(y))), (op_idx, stride)

    print("KERNEL_OK")
</pallas_src>

<mosaic_0001>
module attributes {stable_mosaic.version = 11 : i64} {
  func.func @_sepconv_stage_kernel(%arg0: i32, %arg1: memref<1x16x64xf32, #tpu.memory_space<vmem>>, %arg2: memref<1x64xf32, #tpu.memory_space<vmem>>, %arg3: memref<1x64xf32, #tpu.memory_space<vmem>>, %arg4: memref<3x3x64xf32, #tpu.memory_space<vmem>>, %arg5: memref<64x64xbf16, #tpu.memory_space<vmem>>, %arg6: memref<1x16x64xf32, #tpu.memory_space<vmem>>, %arg7: memref<1x1x64xf32, #tpu.memory_space<vmem>>, %arg8: memref<1x1x64xf32, #tpu.memory_space<vmem>>, %arg9: memref<18x72xf32, #tpu.memory_space<vmem>>) attributes {dimension_semantics = [#tpu.dimension_semantics<parallel>], iteration_bounds = array<i64: 2>, scalar_prefetch = 0 : i64, scratch_operands = 1 : i64, tpu.core_type = #tpu.core_type<tc>, window_params = [{transform_indices = @transform_0, window_bounds = array<i64: 1, 16, 64>}, {pipeline_mode = #tpu.pipeline_mode<synchronous>, transform_indices = @transform_1, window_bounds = array<i64: 1, 64>}, {pipeline_mode = #tpu.pipeline_mode<synchronous>, transform_indices = @transform_2, window_bounds = array<i64: 1, 64>}, {pipeline_mode = #tpu.pipeline_mode<synchronous>, transform_indices = @transform_3, window_bounds = array<i64: 3, 3, 64>}, {pipeline_mode = #tpu.pipeline_mode<synchronous>, transform_indices = @transform_4, window_bounds = array<i64: 64, 64>}, {transform_indices = @transform_5, window_bounds = array<i64: 1, 16, 64>}, {transform_indices = @transform_6, window_bounds = array<i64: 1, 1, 64>}, {transform_indices = @transform_7, window_bounds = array<i64: 1, 1, 64>}]} {
    %cst = arith.constant 0.000000e+00 : f32
    %0 = vector.broadcast %cst : f32 to vector<1x72xf32>
    %c0 = arith.constant 0 : index
    %c0_0 = arith.constant 0 : index
    %1 = vector.load %arg9[%c0, %c0_0] : memref<18x72xf32, #tpu.memory_space<vmem>>, vector<1x72xf32>
    tpu.vector_store %arg9[%c0, %c0_0], %0 {strides = array<i32>} : memref<18x72xf32, #tpu.memory_space<vmem>>, vector<1x72xf32>,
    %cst_1 = arith.constant 0.000000e+00 : f32
    %2 = vector.broadcast %cst_1 : f32 to vector<1x72xf32>
    %c17 = arith.constant 17 : index
    %c0_2 = arith.constant 0 : index
    %3 = vector.load %arg9[%c17, %c0_2] : memref<18x72xf32, #tpu.memory_space<vmem>>, vector<1x72xf32>
    tpu.vector_store %arg9[%c17, %c0_2], %2 {strides = array<i32>} : memref<18x72xf32, #tpu.memory_space<vmem>>, vector<1x72xf32>,
    %cst_3 = arith.constant 0.000000e+00 : f32
    %4 = vector.broadcast %cst_3 : f32 to vector<16x4xf32>
    %c1 = arith.constant 1 : index
    %c0_4 = arith.constant 0 : index
    %5 = vector.load %arg9[%c1, %c0_4] : memref<18x72xf32, #tpu.memory_space<vmem>>, vector<16x4xf32>
    tpu.vector_store %arg9[%c1, %c0_4], %4 {strides = array<i32>} : memref<18x72xf32, #tpu.memory_space<vmem>>, vector<16x4xf32>,
    %cst_5 = arith.constant 0.000000e+00 : f32
    %6 = vector.broadcast %cst_5 : f32 to vector<16x4xf32>
    %c1_6 = arith.constant 1 : index
    %c68 = arith.constant 68 : index
    %7 = vector.load %arg9[%c1_6, %c68] : memref<18x72xf32, #tpu.memory_space<vmem>>, vector<16x4xf32>
    tpu.vector_store %arg9[%c1_6, %c68], %6 {strides = array<i32>} : memref<18x72xf32, #tpu.memory_space<vmem>>, vector<16x4xf32>,
    %c0_7 = arith.constant 0 : index
    %c0_8 = arith.constant 0 : index
    %c0_9 = arith.constant 0 : index
    %8 = vector.load %arg1[%c0_7, %c0_8, %c0_9] : memref<1x16x64xf32, #tpu.memory_space<vmem>>, vector<1x16x64xf32>
    %9 = vector.shape_cast %8 : vector<1x16x64xf32> to vector<16x64xf32>
    %c0_10 = arith.constant 0 : index
    %c0_11 = arith.constant 0 : index
    %10 = vector.load %arg2[%c0_10, %c0_11] : memref<1x64xf32, #tpu.memory_space<vmem>>, vector<1x64xf32>
    %11 = vector.broadcast %10 : vector<1x64xf32> to vector<16x64xf32>
    %12 = arith.mulf %9, %11 : vector<16x64xf32>
    %c0_12 = arith.constant 0 : index
    %c0_13 = arith.constant 0 : index
    %13 = vector.load %arg3[%c0_12, %c0_13] : memref<1x64xf32, #tpu.memory_space<vmem>>, vector<1x64xf32>
    %14 = vector.broadcast %13 : vector<1x64xf32> to vector<16x64xf32>
    %15 = arith.addf %12, %14 : vector<16x64xf32>
    %cst_14 = arith.constant 0.000000e+00 : f32
    %16 = vector.broadcast %cst_14 : f32 to vector<16x64xf32>
    %17 = arith.maximumf %15, %16 : vector<16x64xf32>
    %c1_15 = arith.constant 1 : index
    %c4 = arith.constant 4 : index
    %18 = vector.load %arg9[%c1_15, %c4] : memref<18x72xf32, #tpu.memory_space<vmem>>, vector<16x64xf32>
    tpu.vector_store %arg9[%c1_15, %c4], %17 {strides = array<i32>} : memref<18x72xf32, #tpu.memory_space<vmem>>, vector<16x64xf32>,
    %c0_16 = arith.constant 0 : index
    %c0_17 = arith.constant 0 : index
    %c0_18 = arith.constant 0 : index
    %19 = vector.load %arg4[%c0_16, %c0_17, %c0_18] : memref<3x3x64xf32, #tpu.memory_space<vmem>>, vector<3x3x64xf32>
    %cst_19 = arith.constant 0.000000e+00 : f32
    %20 = vector.broadcast %cst_19 : f32 to vector<16x64xf32>
    %c0_20 = arith.constant 0 : index
    %c0_21 = arith.constant 0 : index
    %21 = vector.load %arg9[%c0_20, %c0_21] : memref<18x72xf32, #tpu.memory_space<vmem>>, vector<16x72xf32>
    %22 = vector.extract_strided_slice %21 {offsets = [0, 0], sizes = [16, 64], strides = [1, 1]} : vector<16x72xf32> to vector<16x64xf32>
    %23 = vector.extract_strided_slice %19 {offsets = [0, 0, 0], sizes = [1, 1, 64], strides = [1, 1, 1]} : vector<3x3x64xf32> to vector<1x1x64xf32>
    %24 = vector.shape_cast %23 : vector<1x1x64xf32> to vector<64xf32>
    %25 = vector.shape_cast %24 : vector<64xf32> to vector<1x64xf32>
    %26 = vector.broadcast %25 : vector<1x64xf32> to vector<16x64xf32>
    %27 = arith.mulf %22, %26 : vector<16x64xf32>
    %28 = arith.addf %20, %27 : vector<16x64xf32>
    %29 = vector.extract_strided_slice %21 {offsets = [0, 4], sizes = [16, 64], strides = [1, 1]} : vector<16x72xf32> to vector<16x64xf32>
    %30 = vector.extract_strided_slice %19 {offsets = [0, 1, 0], sizes = [1, 1, 64], strides = [1, 1, 1]} : vector<3x3x64xf32> to vector<1x1x64xf32>
    %31 = vector.shape_cast %30 : vector<1x1x64xf32> to vector<64xf32>
    %32 = vector.shape_cast %31 : vector<64xf32> to vector<1x64xf32>
    %33 = vector.broadcast %32 : vector<1x64xf32> to vector<16x64xf32>
    %34 = arith.mulf %29, %33 : vector<16x64xf32>
    %35 = arith.addf %28, %34 : vector<16x64xf32>
    %36 = vector.extract_strided_slice %21 {offsets = [0, 8], sizes = [16, 64], strides = [1, 1]} : vector<16x72xf32> to vector<16x64xf32>
    %37 = vector.extract_strided_slice %19 {offsets = [0, 2, 0], sizes = [1, 1, 64], strides = [1, 1, 1]} : vector<3x3x64xf32> to vector<1x1x64xf32>
    %38 = vector.shape_cast %37 : vector<1x1x64xf32> to vector<64xf32>
    %39 = vector.shape_cast %38 : vector<64xf32> to vector<1x64xf32>
    %40 = vector.broadcast %39 : vector<1x64xf32> to vector<16x64xf32>
    %41 = arith.mulf %36, %40 : vector<16x64xf32>
    %42 = arith.addf %35, %41 : vector<16x64xf32>
    %c1_22 = arith.constant 1 : index
    %c0_23 = arith.constant 0 : index
    %43 = vector.load %arg9[%c1_22, %c0_23] : memref<18x72xf32, #tpu.memory_space<vmem>>, vector<16x72xf32>
    %44 = vector.extract_strided_slice %43 {offsets = [0, 0], sizes = [16, 64], strides = [1, 1]} : vector<16x72xf32> to vector<16x64xf32>
    %45 = vector.extract_strided_slice %19 {offsets = [1, 0, 0], sizes = [1, 1, 64], strides = [1, 1, 1]} : vector<3x3x64xf32> to vector<1x1x64xf32>
    %46 = vector.shape_cast %45 : vector<1x1x64xf32> to vector<64xf32>
    %47 = vector.shape_cast %46 : vector<64xf32> to vector<1x64xf32>
    %48 = vector.broadcast %47 : vector<1x64xf32> to vector<16x64xf32>
    %49 = arith.mulf %44, %48 : vector<16x64xf32>
    %50 = arith.addf %42, %49 : vector<16x64xf32>
    %51 = vector.extract_strided_slice %43 {offsets = [0, 4], sizes = [16, 64], strides = [1, 1]} : vector<16x72xf32> to vector<16x64xf32>
    %52 = vector.extract_strided_slice %19 {offsets = [1, 1, 0], sizes = [1, 1, 64], strides = [1, 1, 1]} : vector<3x3x64xf32> to vector<1x1x64xf32>
    %53 = vector.shape_cast %52 : vector<1x1x64xf32> to vector<64xf32>
    %54 = vector.shape_cast %53 : vector<64xf32> to vector<1x64xf32>
    %55 = vector.broadcast %54 : vector<1x64xf32> to vector<16x64xf32>
    %56 = arith.mulf %51, %55 : vector<16x64xf32>
    %57 = arith.addf %50, %56 : vector<16x64xf32>
    %58 = vector.extract_strided_slice %43 {offsets = [0, 8], sizes = [16, 64], strides = [1, 1]} : vector<16x72xf32> to vector<16x64xf32>
    %59 = vector.extract_strided_slice %19 {offsets = [1, 2, 0], sizes = [1, 1, 64], strides = [1, 1, 1]} : vector<3x3x64xf32> to vector<1x1x64xf32>
    %60 = vector.shape_cast %59 : vector<1x1x64xf32> to vector<64xf32>
    %61 = vector.shape_cast %60 : vector<64xf32> to vector<1x64xf32>
    %62 = vector.broadcast %61 : vector<1x64xf32> to vector<16x64xf32>
    %63 = arith.mulf %58, %62 : vector<16x64xf32>
    %64 = arith.addf %57, %63 : vector<16x64xf32>
    %c2 = arith.constant 2 : index
    %c0_24 = arith.constant 0 : index
    %65 = vector.load %arg9[%c2, %c0_24] : memref<18x72xf32, #tpu.memory_space<vmem>>, vector<16x72xf32>
    %66 = vector.extract_strided_slice %65 {offsets = [0, 0], sizes = [16, 64], strides = [1, 1]} : vector<16x72xf32> to vector<16x64xf32>
    %67 = vector.extract_strided_slice %19 {offsets = [2, 0, 0], sizes = [1, 1, 64], strides = [1, 1, 1]} : vector<3x3x64xf32> to vector<1x1x64xf32>
    %68 = vector.shape_cast %67 : vector<1x1x64xf32> to vector<64xf32>
    %69 = vector.shape_cast %68 : vector<64xf32> to vector<1x64xf32>
    %70 = vector.broadcast %69 : vector<1x64xf32> to vector<16x64xf32>
    %71 = arith.mulf %66, %70 : vector<16x64xf32>
    %72 = arith.addf %64, %71 : vector<16x64xf32>
    %73 = vector.extract_strided_slice %65 {offsets = [0, 4], sizes = [16, 64], strides = [1, 1]} : vector<16x72xf32> to vector<16x64xf32>
    %74 = vector.extract_strided_slice %19 {offsets = [2, 1, 0], sizes = [1, 1, 64], strides = [1, 1, 1]} : vector<3x3x64xf32> to vector<1x1x64xf32>
    %75 = vector.shape_cast %74 : vector<1x1x64xf32> to vector<64xf32>
    %76 = vector.shape_cast %75 : vector<64xf32> to vector<1x64xf32>
    %77 = vector.broadcast %76 : vector<1x64xf32> to vector<16x64xf32>
    %78 = arith.mulf %73, %77 : vector<16x64xf32>
    %79 = arith.addf %72, %78 : vector<16x64xf32>
    %80 = vector.extract_strided_slice %65 {offsets = [0, 8], sizes = [16, 64], strides = [1, 1]} : vector<16x72xf32> to vector<16x64xf32>
    %81 = vector.extract_strided_slice %19 {offsets = [2, 2, 0], sizes = [1, 1, 64], strides = [1, 1, 1]} : vector<3x3x64xf32> to vector<1x1x64xf32>
    %82 = vector.shape_cast %81 : vector<1x1x64xf32> to vector<64xf32>
    %83 = vector.shape_cast %82 : vector<64xf32> to vector<1x64xf32>
    %84 = vector.broadcast %83 : vector<1x64xf32> to vector<16x64xf32>
    %85 = arith.mulf %80, %84 : vector<16x64xf32>
    %86 = arith.addf %79, %85 : vector<16x64xf32>
    %87 = arith.truncf %86 : vector<16x64xf32> to vector<16x64xbf16>
    %c0_25 = arith.constant 0 : index
    %c0_26 = arith.constant 0 : index
    %88 = vector.load %arg5[%c0_25, %c0_26] : memref<64x64xbf16, #tpu.memory_space<vmem>>, vector<64x64xbf16>
    %cst_27 = arith.constant dense<0.000000e+00> : vector<16x64xf32>
    %89 = tpu.matmul %87, %88, %cst_27 {dimension_numbers = #tpu.dot_dimension_numbers<[1], [0], [0], [1], [0, 0, 1, 1], [], []>} : vector<16x64xbf16>, vector<64x64xbf16>, vector<16x64xf32> -> vector<16x64xf32>
    %c0_28 = arith.constant 0 : index
    %c0_29 = arith.constant 0 : index
    %c0_30 = arith.constant 0 : index
    %90 = vector.load %arg6[%c0_28, %c0_29, %c0_30] : memref<1x16x64xf32, #tpu.memory_space<vmem>>, vector<1x16x64xf32>
    %91 = vector.shape_cast %90 : vector<1x16x64xf32> to vector<16x64xf32>
    %92 = vector.shape_cast %89 : vector<16x64xf32> to vector<1x16x64xf32>
    tpu.vector_store %arg6[%c0_28, %c0_29, %c0_30], %92 {strides = array<i32>} : memref<1x16x64xf32, #tpu.memory_space<vmem>>, vector<1x16x64xf32>,
    %cst_31 = arith.constant dense<0.000000e+00> : vector<64xf32>
    %93 = vector.multi_reduction <add>, %89, %cst_31 [0] : vector<16x64xf32> to vector<64xf32>
    %94 = vector.shape_cast %93 : vector<64xf32> to vector<1x64xf32>
    %c0_32 = arith.constant 0 : index
    %c0_33 = arith.constant 0 : index
    %c0_34 = arith.constant 0 : index
    %95 = vector.load %arg7[%c0_32, %c0_33, %c0_34] : memref<1x1x64xf32, #tpu.memory_space<vmem>>, vector<1x1x64xf32>
    %96 = vector.shape_cast %95 : vector<1x1x64xf32> to vector<1x64xf32>
    %97 = vector.shape_cast %94 : vector<1x64xf32> to vector<1x1x64xf32>
    tpu.vector_store %arg7[%c0_32, %c0_33, %c0_34], %97 {strides = array<i32>} : memref<1x1x64xf32, #tpu.memory_space<vmem>>, vector<1x1x64xf32>,
    %98 = arith.mulf %89, %89 : vector<16x64xf32>
    %cst_35 = arith.constant dense<0.000000e+00> : vector<64xf32>
    %99 = vector.multi_reduction <add>, %98, %cst_35 [0] : vector<16x64xf32> to vector<64xf32>
    %100 = vector.shape_cast %99 : vector<64xf32> to vector<1x64xf32>
    %c0_36 = arith.constant 0 : index
    %c0_37 = arith.constant 0 : index
    %c0_38 = arith.constant 0 : index
    %101 = vector.load %arg8[%c0_36, %c0_37, %c0_38] : memref<1x1x64xf32, #tpu.memory_space<vmem>>, vector<1x1x64xf32>
    %102 = vector.shape_cast %101 : vector<1x1x64xf32> to vector<1x64xf32>
    %103 = vector.shape_cast %100 : vector<1x64xf32> to vector<1x1x64xf32>
    tpu.vector_store %arg8[%c0_36, %c0_37, %c0_38], %103 {strides = array<i32>} : memref<1x1x64xf32, #tpu.memory_space<vmem>>, vector<1x1x64xf32>,
    return
  }
  func.func @transform_0(%arg0: i32) -> (i32, i32, i32) {
    %c0_i32 = arith.constant 0 : i32
    %c0_i32_0 = arith.constant 0 : i32
    %c0_i32_1 = arith.constant 0 : i32
    return %arg0, %c0_i32, %c0_i32_0 : i32, i32, i32
  }
  func.func @transform_1(%arg0: i32) -> (i32, i32) {
    %c0_i32 = arith.constant 0 : i32
    %c0_i32_0 = arith.constant 0 : i32
    %c0_i32_1 = arith.constant 0 : i32
    return %c0_i32, %c0_i32_0 : i32, i32
  }
  func.func @transform_2(%arg0: i32) -> (i32, i32) {
    %c0_i32 = arith.constant 0 : i32
    %c0_i32_0 = arith.constant 0 : i32
    %c0_i32_1 = arith.constant 0 : i32
    return %c0_i32, %c0_i32_0 : i32, i32
  }
  func.func @transform_3(%arg0: i32) -> (i32, i32, i32) {
    %c0_i32 = arith.constant 0 : i32
    %c0_i32_0 = arith.constant 0 : i32
    %c0_i32_1 = arith.constant 0 : i32
    %c0_i32_2 = arith.constant 0 : i32
    return %c0_i32, %c0_i32_0, %c0_i32_1 : i32, i32, i32
  }
  func.func @transform_4(%arg0: i32) -> (i32, i32) {
    %c0_i32 = arith.constant 0 : i32
    %c0_i32_0 = arith.constant 0 : i32
    %c0_i32_1 = arith.constant 0 : i32
    return %c0_i32, %c0_i32_0 : i32, i32
  }
  func.func @transform_5(%arg0: i32) -> (i32, i32, i32) {
    %c0_i32 = arith.constant 0 : i32
    %c0_i32_0 = arith.constant 0 : i32
    %c0_i32_1 = arith.constant 0 : i32
    return %arg0, %c0_i32, %c0_i32_0 : i32, i32, i32
  }
  func.func @transform_6(%arg0: i32) -> (i32, i32, i32) {
    %c0_i32 = arith.constant 0 : i32
    %c0_i32_0 = arith.constant 0 : i32
    %c0_i32_1 = arith.constant 0 : i32
    return %arg0, %c0_i32, %c0_i32_0 : i32, i32, i32
  }
  func.func @transform_7(%arg0: i32) -> (i32, i32, i32) {
    %c0_i32 = arith.constant 0 : i32
    %c0_i32_0 = arith.constant 0 : i32
    %c0_i32_1 = arith.constant 0 : i32
    return %arg0, %c0_i32, %c0_i32_0 : i32, i32, i32
  }
}

</mosaic_0001>

<llo_original>
// kernel: tpu_custom_call.1
$region0: #{tpu_custom_call.1}
  #allocation0 [shape = 'u32[]', space=smem, size = 0x4, offset = 0x4, fixed_abs, tag = 'smem constant byte address 0x4 - core index']
  #allocation1 [shape = 'u32[72,128]{1,0:T(1,128)}', space=vmem, size = 0x9000, scoped, tag = 'internal scratch']
  #allocation2 [shape = 'f32[18,72]{1,0:T(8,128)}', space=vmem, size = 0x3000, scoped, tag = 'scratch operand']
  %s0 = inlined_call_operand.hbm [shape: f32[2,16,64], index: 0, kind: input, shape index: {}]
  %s1 = inlined_call_operand.hbm [shape: f32[1,64], index: 1, kind: input, shape index: {}]
  %s2 = inlined_call_operand.vmem [shape: f32[1,64], index: 2, kind: input, shape index: {}]
  %s3 = inlined_call_operand.hbm [shape: f32[3,3,64], index: 3, kind: input, shape index: {}]
  %s4 = inlined_call_operand.hbm [shape: bf16[64,64], index: 4, kind: input, shape index: {}]
  %s5 = inlined_call_operand.hbm [shape: f32[2,16,64], index: 5, kind: output, shape index: {0}]
  %s6 = inlined_call_operand.hbm [shape: f32[2,1,64], index: 6, kind: output, shape index: {1}]
  %s7 = inlined_call_operand.hbm [shape: f32[2,1,64], index: 7, kind: output, shape index: {2}]
  %8 = xla_tuple %s5, %s6, %s7
  %s9 = sld [smem:[#allocation0]]
  $region85: #{tpu_custom_call.1} parent=0
    _
  %s11 = ssub.s32 1, %s9
  %s12 = scalar_select 0, %s11, %s9
  $region1: #{tpu_custom_call.1} parent=0
    #allocation3 [shape = 'u8[16384]{0}', space=vmem, size = 0x4000, scoped, tag = 'input window, operand 0']
    #allocation4 [shape = 's32[2]{0}', space=sflag, size = 0x8, scoped, tag = 'scoped memory for tpu_custom_call.1']
    #allocation5 [shape = 's32[2]{0}', space=sflag, size = 0x8, scoped, tag = 'scoped memory for tpu_custom_call.1']
    #allocation6 [shape = 'u8[512]{0}', space=vmem, size = 0x400, scoped, tag = 'input window, operand 1, single buffered']
    #allocation7 [shape = 's32[1]{0}', space=sflag, size = 0x4, scoped, tag = 'scoped memory for tpu_custom_call.1']
    #allocation8 [shape = 'u8[6144]{0}', space=vmem, size = 0x1800, scoped, tag = 'input window, operand 3, single buffered']
    #allocation9 [shape = 'u8[16384]{0}', space=vmem, size = 0x4000, scoped, tag = 'input window, operand 4, single buffered']
    #allocation10 [shape = 's32[1]{0}', space=sflag, size = 0x4, scoped, tag = 'scoped memory for tpu_custom_call.1']
    #allocation11 [shape = 'u8[16384]{0}', space=vmem, size = 0x4000, scoped, tag = 'output window, operand 0']
    #allocation12 [shape = 'u8[1024]{0}', space=vmem, size = 0x400, scoped, tag = 'output window, operand 1']
    #allocation13 [shape = 's32[2]{0}', space=sflag, size = 0x8, scoped, tag = 'scoped memory for tpu_custom_call.1']
    #allocation14 [shape = 'u8[1024]{0}', space=vmem, size = 0x400, scoped, tag = 'output window, operand 2']
    %13 = vsyncpa [#allocation4], 0
    %s14 = scalar_lea.sflag [#allocation4], 1
    %15 = vsyncpa %s14, 0
    %16 = vsyncpa [#allocation7], 0
    %17 = vsyncpa [#allocation10], 0
    %18 = vsyncpa [#allocation5], 0
    %s19 = scalar_lea.sflag [#allocation5], 1
    %20 = vsyncpa %s19, 0
    %21 = vsyncpa [#allocation13], 0
    %s22 = scalar_lea.sflag [#allocation13], 1
    %23 = vsyncpa %s22, 0
    loop: start=0, step=1, limit=4
    $region2: #{tpu_custom_call.1} parent=1 // loop_pre_header
      _
    $region3: #{tpu_custom_call.1} parent=1 // loop_header
      %s25 = sphi 0, %s29
      %p26 = scmp.ge.s32.totalorder %s25, 4
      %s35 = sphi 0, %s37
      %s38 = sphi 0, %s35
      %s39 = sphi 0, %s38
      %s55 = sphi 0, %s39
      %s59 = sphi 0, %s59
      %s61 = sphi 0, %s59
      %s62 = sphi 0, %s61
      %s76 = sphi 0, %s62
      %s80 = sphi 0, %s80
      %s82 = sphi 0, %s80
      %s83 = sphi 0, %s82
      %s97 = sphi 0, %s83
      %s101 = sphi 0, %s101
      %s103 = sphi 0, %s101
      %s104 = sphi 0, %s103
      %s118 = sphi 0, %s104
      %s122 = sphi 0, %s122
      %s124 = sphi 0, %s122
      %s125 = sphi 0, %s124
      %s139 = sphi 0, %s125
      %s145 = sphi 0, %s147
      %s148 = sphi 0, %s145
      %s149 = sphi 0, %s148
      %s165 = sphi 0, %s149
      %s171 = sphi 0, %s173
      %s174 = sphi 0, %s171
      %s175 = sphi 0, %s174
      %s191 = sphi 0, %s175
      %s197 = sphi 0, %s199
      %s200 = sphi 0, %s197
      %s201 = sphi 0, %s200
      %s217 = sphi 0, %s201
    $region4: #{tpu_custom_call.1} parent=1 // loop_header_branch
      %28 = sbr.rel (%p26) target = $region8
    $region5: #{tpu_custom_call.1} parent=1 // loop_body
      %s30 = ssub.s32 %s25, 1
      %s31 = ssub.s32 %s25, 2
      %s32 = sadd.s32 %s25, 1
      %s33 = ssub.s32 %s25, %s32
      %p34 = scmp.eq.s32.totalorder %s33, 0
      %s36 = sadd.s32 %s35, 1
      %s37 = scalar_select %p34, %s35, %s36
      %p40 = pneg %p34
      %p41 = scmp.eq.s32.totalorder %s25, 1
      %p42 = por %p40, %p41
      %p43 = scmp.ne.s32.totalorder %s35, %s38
      %p44 = scmp.eq.s32.totalorder %s25, 0
      %p45 = por %p43, %p44
      %p46 = scmp.ne.s32.totalorder %s35, %s38
      %p47 = scmp.eq.s32.totalorder %s30, 1
      %p48 = por %p46, %p47
      %p49 = scmp.ne.s32.totalorder %s38, %s39
      %p50 = scmp.eq.s32.totalorder %s30, 0
      %p51 = por %p49, %p50
      %p52 = scmp.ne.s32.totalorder %s38, %s39
      %p53 = scmp.eq.s32.totalorder %s31, 1
      %p54 = por %p52, %p53
      %p56 = scmp.ne.s32.totalorder %s39, %s55
      %p57 = scmp.eq.s32.totalorder %s31, 0
      %p58 = por %p56, %p57
      %s60 = sadd.s32 %s59, 1
      %p63 = scmp.eq.s32.totalorder %s25, 1
      %p64 = scmp.ne.s32.totalorder %s59, %s61
      %p65 = scmp.eq.s32.totalorder %s25, 0
      %p66 = por %p64, %p65
      %p67 = scmp.ne.s32.totalorder %s59, %s61
      %p68 = scmp.eq.s32.totalorder %s30, 1
      %p69 = por %p67, %p68
      %p70 = scmp.ne.s32.totalorder %s61, %s62
      %p71 = scmp.eq.s32.totalorder %s30, 0
      %p72 = por %p70, %p71
      %p73 = scmp.ne.s32.totalorder %s61, %s62
      %p74 = scmp.eq.s32.totalorder %s31, 1
      %p75 = por %p73, %p74
      %p77 = scmp.ne.s32.totalorder %s62, %s76
      %p78 = scmp.eq.s32.totalorder %s31, 0
      %p79 = por %p77, %p78
      %s81 = sadd.s32 %s80, 1
      %p84 = scmp.eq.s32.totalorder %s25, 1
      %p85 = scmp.ne.s32.totalorder %s80, %s82
      %p86 = scmp.eq.s32.totalorder %s25, 0
      %p87 = por %p85, %p86
      %p88 = scmp.ne.s32.totalorder %s80, %s82
      %p89 = scmp.eq.s32.totalorder %s30, 1
      %p90 = por %p88, %p89
      %p91 = scmp.ne.s32.totalorder %s82, %s83
      %p92 = scmp.eq.s32.totalorder %s30, 0
      %p93 = por %p91, %p92
      %p94 = scmp.ne.s32.totalorder %s82, %s83
      %p95 = scmp.eq.s32.totalorder %s31, 1
      %p96 = por %p94, %p95
      %p98 = scmp.ne.s32.totalorder %s83, %s97
      %p99 = scmp.eq.s32.totalorder %s31, 0
      %p100 = por %p98, %p99
      %s102 = sadd.s32 %s101, 1
      %p105 = scmp.eq.s32.totalorder %s25, 1
      %p106 = scmp.ne.s32.totalorder %s101, %s103
      %p107 = scmp.eq.s32.totalorder %s25, 0
      %p108 = por %p106, %p107
      %p109 = scmp.ne.s32.totalorder %s101, %s103
      %p110 = scmp.eq.s32.totalorder %s30, 1
      %p111 = por %p109, %p110
      %p112 = scmp.ne.s32.totalorder %s103, %s104
      %p113 = scmp.eq.s32.totalorder %s30, 0
      %p114 = por %p112, %p113
      %p115 = scmp.ne.s32.totalorder %s103, %s104
      %p116 = scmp.eq.s32.totalorder %s31, 1
      %p117 = por %p115, %p116
      %p119 = scmp.ne.s32.totalorder %s104, %s118
      %p120 = scmp.eq.s32.totalorder %s31, 0
      %p121 = por %p119, %p120
      %s123 = sadd.s32 %s122, 1
      %p126 = scmp.eq.s32.totalorder %s25, 1
      %p127 = scmp.ne.s32.totalorder %s122, %s124
      %p128 = scmp.eq.s32.totalorder %s25, 0
      %p129 = por %p127, %p128
      %p130 = scmp.ne.s32.totalorder %s122, %s124
      %p131 = scmp.eq.s32.totalorder %s30, 1
      %p132 = por %p130, %p131
      %p133 = scmp.ne.s32.totalorder %s124, %s125
      %p134 = scmp.eq.s32.totalorder %s30, 0
      %p135 = por %p133, %p134
      %p136 = scmp.ne.s32.totalorder %s124, %s125
      %p137 = scmp.eq.s32.totalorder %s31, 1
      %p138 = por %p136, %p137
      %p140 = scmp.ne.s32.totalorder %s125, %s139
      %p141 = scmp.eq.s32.totalorder %s31, 0
      %p142 = por %p140, %p141
      %s143 = ssub.s32 %s25, %s32
      %p144 = scmp.eq.s32.totalorder %s143, 0
      %s146 = sadd.s32 %s145, 1
      %s147 = scalar_select %p144, %s145, %s146
      %p150 = pneg %p144
      %p151 = scmp.eq.s32.totalorder %s25, 1
      %p152 = por %p150, %p151
      %p153 = scmp.ne.s32.totalorder %s145, %s148
      %p154 = scmp.eq.s32.totalorder %s25, 0
      %p155 = por %p153, %p154
      %p156 = scmp.ne.s32.totalorder %s145, %s148
      %p157 = scmp.eq.s32.totalorder %s30, 1
      %p158 = por %p156, %p157
      %p159 = scmp.ne.s32.totalorder %s148, %s149
      %p160 = scmp.eq.s32.totalorder %s30, 0
      %p161 = por %p159, %p160
      %p162 = scmp.ne.s32.totalorder %s148, %s149
      %p163 = scmp.eq.s32.totalorder %s31, 1
      %p164 = por %p162, %p163
      %p166 = scmp.ne.s32.totalorder %s149, %s165
      %p167 = scmp.eq.s32.totalorder %s31, 0
      %p168 = por %p166, %p167
      %s169 = ssub.s32 %s25, %s32
      %p170 = scmp.eq.s32.totalorder %s169, 0
      %s172 = sadd.s32 %s171, 1
      %s173 = scalar_select %p170, %s171, %s172
      %p176 = pneg %p170
      %p177 = scmp.eq.s32.totalorder %s25, 1
      %p178 = por %p176, %p177
      %p179 = scmp.ne.s32.totalorder %s171, %s174
      %p180 = scmp.eq.s32.totalorder %s25, 0
      %p181 = por %p179, %p180
      %p182 = scmp.ne.s32.totalorder %s171, %s174
      %p183 = scmp.eq.s32.totalorder %s30, 1
      %p184 = por %p182, %p183
      %p185 = scmp.ne.s32.totalorder %s174, %s175
      %p186 = scmp.eq.s32.totalorder %s30, 0
      %p187 = por %p185, %p186
      %p188 = scmp.ne.s32.totalorder %s174, %s175
      %p189 = scmp.eq.s32.totalorder %s31, 1
      %p190 = por %p188, %p189
      %p192 = scmp.ne.s32.totalorder %s175, %s191
      %p193 = scmp.eq.s32.totalorder %s31, 0
      %p194 = por %p192, %p193
      %s195 = ssub.s32 %s25, %s32
      %p196 = scmp.eq.s32.totalorder %s195, 0
      %s198 = sadd.s32 %s197, 1
      %s199 = scalar_select %p196, %s197, %s198
      %p202 = pneg %p196
      %p203 = scmp.eq.s32.totalorder %s25, 1
      %p204 = por %p202, %p203
      %p205 = scmp.ne.s32.totalorder %s197, %s200
      %p206 = scmp.eq.s32.totalorder %s25, 0
      %p207 = por %p205, %p206
      %p208 = scmp.ne.s32.totalorder %s197, %s200
      %p209 = scmp.eq.s32.totalorder %s30, 1
      %p210 = por %p208, %p209
      %p211 = scmp.ne.s32.totalorder %s200, %s201
      %p212 = scmp.eq.s32.totalorder %s30, 0
      %p213 = por %p211, %p212
      %p214 = scmp.ne.s32.totalorder %s200, %s201
      %p215 = scmp.eq.s32.totalorder %s31, 1
      %p216 = por %p214, %p215
      %p218 = scmp.ne.s32.totalorder %s201, %s217
      %p219 = scmp.eq.s32.totalorder %s31, 0
      %p220 = por %p218, %p219
      %p221 = scmp.le.s32.totalorder 1, %s25
      %p222 = scmp.lt.s32.totalorder %s25, 3
      %p223 = pnand %p221, %p222
      %p224 = pneg %p223
      // Predicated region
      $region9: #{tpu_custom_call.1} parent=5 // pred_check
        _
      $region10: #{tpu_custom_call.1} parent=5 // pred_check_branch
        %226 = sbr.rel (%p223) target = $region12
      $region11: #{tpu_custom_call.1} parent=5 // pred_region
        %s227 = ssub.s32 %s25, 1
        // Predicated region
        $region13: #{tpu_custom_call.1} parent=11 // pred_check
          %p228 = pneg %p72
        $region14: #{tpu_custom_call.1} parent=11 // pred_check_branch
          %230 = sbr.rel (%p228) target = $region16
        $region15: #{tpu_custom_call.1} parent=11 // pred_region
          %232 = vsyncadd [#allocation7], 0
          %s234 = sshll.u32 %s1, 4
          %s235 = int_to_ptr.hbm [resolvable:$true] %s234
          %s236 = sshll.u32 [#allocation6], 4
          %s237 = int_to_ptr.vmem [resolvable:$true] %s236
          %239 = dma.hbm_to_vmem [thread:$0]  %s235, 16, %s237, [#allocation7]
        $region16: #{tpu_custom_call.1} parent=11 // pred_fallthru
          _
        // Predicated region
        $region17: #{tpu_custom_call.1} parent=11 // pred_check
          %p240 = pneg %p93
        $region18: #{tpu_custom_call.1} parent=11 // pred_check_branch
          %242 = sbr.rel (%p240) target = $region20
        $region19: #{tpu_custom_call.1} parent=11 // pred_region
          _
        $region20: #{tpu_custom_call.1} parent=11 // pred_fallthru
          _
        // Predicated region
        $region21: #{tpu_custom_call.1} parent=11 // pred_check
          %p243 = pneg %p114
        $region22: #{tpu_custom_call.1} parent=11 // pred_check_branch
          %245 = sbr.rel (%p243) target = $region24
        $region23: #{tpu_custom_call.1} parent=11 // pred_region
          %247 = vsyncadd [#allocation7], 0
          %s248 = sshll.u32 %s3, 4
          %s249 = int_to_ptr.hbm [resolvable:$true] %s248
          %s250 = sshll.u32 [#allocation8], 4
          %s251 = int_to_ptr.vmem [resolvable:$true] %s250
          %256 = dma.hbm_to_vmem [thread:$0]  %s249, 192, %s251, [#allocation7], 64, 64, 4
        $region24: #{tpu_custom_call.1} parent=11 // pred_fallthru
          _
        // Predicated region
        $region25: #{tpu_custom_call.1} parent=11 // pred_check
          %p257 = pneg %p135
        $region26: #{tpu_custom_call.1} parent=11 // pred_check_branch
          %259 = sbr.rel (%p257) target = $region28
        $region27: #{tpu_custom_call.1} parent=11 // pred_region
          %261 = vsyncadd [#allocation10], 0
          %s262 = sshll.u32 %s4, 4
          %s263 = int_to_ptr.hbm [resolvable:$true] %s262
          %s264 = sshll.u32 [#allocation9], 4
          %s265 = int_to_ptr.vmem [resolvable:$true] %s264
          %270 = dma.hbm_to_vmem [thread:$0]  %s263, 512, %s265, [#allocation10], 64, 64, 4
        $region28: #{tpu_custom_call.1} parent=11 // pred_fallthru
          _
      $region12: #{tpu_custom_call.1} parent=5 // pred_fallthru
        _
      %p271 = scmp.lt.s32.totalorder %s25, 2
      // Predicated region
      $region29: #{tpu_custom_call.1} parent=5 // pred_check
        %p272 = pneg %p271
      $region30: #{tpu_custom_call.1} parent=5 // pred_check_branch
        %274 = sbr.rel (%p272) target = $region32
      $region31: #{tpu_custom_call.1} parent=5 // pred_region
        // Predicated region
        $region33: #{tpu_custom_call.1} parent=31 // pred_check
          %p275 = pneg %p45
        $region34: #{tpu_custom_call.1} parent=31 // pred_check_branch
          %277 = sbr.rel (%p275) target = $region36
        $region35: #{tpu_custom_call.1} parent=31 // pred_region
          %s278 = sand.u32 %s35, 1
          %s279 = scalar_lea.sflag [#allocation4], %s278
          %s280 = sand.u32 %s35, 1
          %s281 = smul.addr %s280, 16
          %s282 = scalar_lea.vmem [#allocation3], %s281
          %284 = vsyncadd %s279, 0
          %s285 = smul.addr %s25, 2
          %s286 = smul.addr %s285, 8
          %s287 = scalar_lea.hbm %s0, %s286
          %s288 = sshll.u32 %s287, 4
          %s289 = int_to_ptr.hbm [resolvable:$true] %s288
          %s290 = sshll.u32 %s282, 4
          %s291 = int_to_ptr.vmem [resolvable:$true] %s290
          %296 = dma.hbm_to_vmem [thread:$0]  %s289, 256, %s291, %s279, 128, 128, 8
        $region36: #{tpu_custom_call.1} parent=31 // pred_fallthru
          _
      $region32: #{tpu_custom_call.1} parent=5 // pred_fallthru
        _
      %p297 = scmp.le.s32.totalorder 1, %s25
      %p298 = scmp.lt.s32.totalorder %s25, 3
      %p299 = pnand %p297, %p298
      %p300 = pneg %p299
      // Predicated region
      $region37: #{tpu_custom_call.1} parent=5 // pred_check
        _
      $region38: #{tpu_custom_call.1} parent=5 // pred_check_branch
        %302 = sbr.rel (%p299) target = $region40
      $region39: #{tpu_custom_call.1} parent=5 // pred_region
        %s303 = ssub.s32 %s25, 1
        %s304 = sand.u32 %s38, 1
        %s305 = scalar_lea.sflag [#allocation4], %s304
        %s306 = sand.u32 %s38, 1
        %s307 = smul.addr %s306, 16
        %s308 = scalar_lea.vmem [#allocation3], %s307
        // Predicated region
        $region41: #{tpu_custom_call.1} parent=39 // pred_check
          %p309 = pneg %p51
        $region42: #{tpu_custom_call.1} parent=39 // pred_check_branch
          %311 = sbr.rel (%p309) target = $region44
        $region43: #{tpu_custom_call.1} parent=39 // pred_region
          %313 = dma.done %s305, 256
        $region44: #{tpu_custom_call.1} parent=39 // pred_fallthru
          _
        // Predicated region
        $region45: #{tpu_custom_call.1} parent=39 // pred_check
          %p314 = pneg %p72
        $region46: #{tpu_custom_call.1} parent=39 // pred_check_branch
          %316 = sbr.rel (%p314) target = $region48
        $region47: #{tpu_custom_call.1} parent=39 // pred_region
          %318 = dma.done [#allocation7], 16
        $region48: #{tpu_custom_call.1} parent=39 // pred_fallthru
          _
        // Predicated region
        $region49: #{tpu_custom_call.1} parent=39 // pred_check
          %p319 = pneg %p114
        $region50: #{tpu_custom_call.1} parent=39 // pred_check_branch
          %321 = sbr.rel (%p319) target = $region52
        $region51: #{tpu_custom_call.1} parent=39 // pred_region
          %323 = dma.done [#allocation7], 192
        $region52: #{tpu_custom_call.1} parent=39 // pred_fallthru
          _
        // Predicated region
        $region53: #{tpu_custom_call.1} parent=39 // pred_check
          %p324 = pneg %p135
        $region54: #{tpu_custom_call.1} parent=39 // pred_check_branch
          %326 = sbr.rel (%p324) target = $region56
        $region55: #{tpu_custom_call.1} parent=39 // pred_region
          %328 = dma.done [#allocation10], 512
        $region56: #{tpu_custom_call.1} parent=39 // pred_fallthru
          _
        %s329 = sand.u32 %s38, 1
        %s330 = scalar_lea.sflag [#allocation4], %s329
        %s331 = sand.u32 %s38, 1
        %s332 = smul.addr %s331, 16
        %s333 = scalar_lea.vmem [#allocation3], %s332
        %p334 = pneg %p51
        %p335 = pneg %p48
        %p336 = pneg %p72
        %p337 = pneg %p69
        %p338 = pneg %p93
        %p339 = pneg %p90
        %p340 = pneg %p114
        %p341 = pneg %p111
        %p342 = pneg %p135
        %p343 = pneg %p132
        %p344 = pneg %p161
        %p345 = pneg %p158
        %s346 = sand.u32 %s148, 1
        %s347 = scalar_lea.sflag [#allocation5], %s346
        %s348 = sand.u32 %s148, 1
        %s349 = smul.addr %s348, 16
        %s350 = scalar_lea.vmem [#allocation11], %s349
        %p351 = pneg %p187
        %p352 = pneg %p184
        %s353 = sand.u32 %s30, 1
        %s354 = scalar_lea.sflag [#allocation13], %s353
        %s355 = sand.u32 %s174, 1
        %s356 = scalar_lea.vmem [#allocation12], %s355
        %p357 = pneg %p213
        %p358 = pneg %p210
        %s359 = sand.u32 %s30, 1
        %s360 = scalar_lea.sflag [#allocation13], %s359
        %s361 = sand.u32 %s200, 1
        %s362 = scalar_lea.vmem [#allocation14], %s361
        %vm364 = vcmask 581632
        %365 = vst.msk [vmem:[#allocation2] sm:$0x1] %vm364, 0.0
        %366 = vst.msk [vmem:[#allocation2 + $0x11] sm:$0x1] %vm364, 0.0
        %vm367 = vcmask 31744
        %368 = vst.msk [vmem:[#allocation2 + $0x1] sm:$0xff] %vm367, 0.0
        %369 = vst.msk [vmem:[#allocation2 + $0x9] sm:$0xff] %vm367, 0.0
        %vm370 = vcmask 589344
        %371 = vst.msk [vmem:[#allocation2 + $0x1] sm:$0xff] %vm370, 0.0
        %372 = vst.msk [vmem:[#allocation2 + $0x9] sm:$0xff] %vm370, 0.0
        %v373 = vld [vmem:[%s308] sm:$0xff]
        %v374 = vld [vmem:[%s308 + $0x8] sm:$0xff]
        %v375 = vld [vmem:[#allocation6] sm:$0x1]
        %v377 = vperm.slane %v375, 0
        %v379 = vmul.f32 %v373, %v377
        %v380 = vmul.f32 %v374, %v377
        %v381 = vld [vmem:[%s2] sm:$0x1]
        %v383 = vperm.slane %v381, 0
        %v385 = vadd.f32 %v379, %v383
        %v386 = vadd.f32 %v380, %v383
        %v387 = vmax.f32 %v385, 0.0
        %v388 = vmax.f32 %v386, 0.0
        %391 = vrot.lane.b32.xlu0 %v387, 4
        %v392 = vpop.permute.xlu0 %391
        %393 = vrot.lane.b32.xlu0 %v388, 4
        %v394 = vpop.permute.xlu0 %393
        %vm397 = vcmask 556064
        %398 = vst.msk [vmem:[#allocation2 + $0x1] sm:$0xff] %vm397, %v392
        %399 = vst.msk [vmem:[#allocation2 + $0x9] sm:$0xff] %vm397, %v394
        %v400 = vld [vmem:[#allocation8] sm:$0x7]
        %v401 = vld [vmem:[#allocation8 + $0x4] sm:$0x7]
        %v402 = vld [vmem:[#allocation8 + $0x8] sm:$0x7]
        %v403 = vld [vmem:[#allocation2] sm:$0xff]
        %v404 = vld [vmem:[#allocation2 + $0x8] sm:$0xff]
        %v405 = vperm.slane %v400, 0
        %v406 = vmul.f32 %v403, %v405
        %v407 = vmul.f32 %v404, %v405
        %v408 = vadd.f32 %v406, 0.0
        %v409 = vadd.f32 %v407, 0.0
        %v410 = vperm.slane %v400, 1
        %412 = vrot.lane.b32.xlu0 %v410, 4
        %v413 = vpop.permute.xlu0 %412
        %v415 = vmul.f32 %v403, %v413
        %v416 = vmul.f32 %v404, %v413
        %419 = vrot.lane.b32.xlu0 %v415, 124
        %v420 = vpop.permute.xlu0 %419
        %421 = vrot.lane.b32.xlu0 %v416, 124
        %v422 = vpop.permute.xlu0 %421
        %v425 = vadd.f32 %v408, %v420
        %v426 = vadd.f32 %v409, %v422
        %v427 = vperm.slane %v400, 2
        %429 = vrot.lane.b32.xlu0 %v427, 8
        %v430 = vpop.permute.xlu0 %429
        %v432 = vmul.f32 %v403, %v430
        %v433 = vmul.f32 %v404, %v430
        %436 = vrot.lane.b32.xlu0 %v432, 120
        %v437 = vpop.permute.xlu0 %436
        %438 = vrot.lane.b32.xlu0 %v433, 120
        %v439 = vpop.permute.xlu0 %438
        %v442 = vadd.f32 %v425, %v437
        %v443 = vadd.f32 %v426, %v439
        %v444 = vld [vmem:[#allocation2 + $0x1] sm:$0xff]
        %v445 = vld [vmem:[#allocation2 + $0x9] sm:$0xff]
        %v446 = vperm.slane %v401, 0
        %v447 = vmul.f32 %v444, %v446
        %v448 = vmul.f32 %v445, %v446
        %v449 = vadd.f32 %v442, %v447
        %v450 = vadd.f32 %v443, %v448
        %v451 = vperm.slane %v401, 1
        %453 = vrot.lane.b32.xlu0 %v451, 4
        %v454 = vpop.permute.xlu0 %453
        %v456 = vmul.f32 %v444, %v454
        %v457 = vmul.f32 %v445, %v454
        %460 = vrot.lane.b32.xlu0 %v456, 124
        %v461 = vpop.permute.xlu0 %460
        %462 = vrot.lane.b32.xlu0 %v457, 124
        %v463 = vpop.permute.xlu0 %462
        %v466 = vadd.f32 %v449, %v461
        %v467 = vadd.f32 %v450, %v463
        %v468 = vperm.slane %v401, 2
        %470 = vrot.lane.b32.xlu0 %v468, 8
        %v471 = vpop.permute.xlu0 %470
        %v473 = vmul.f32 %v444, %v471
        %v474 = vmul.f32 %v445, %v471
        %477 = vrot.lane.b32.xlu0 %v473, 120
        %v478 = vpop.permute.xlu0 %477
        %479 = vrot.lane.b32.xlu0 %v474, 120
        %v480 = vpop.permute.xlu0 %479
        %v483 = vadd.f32 %v466, %v478
        %v484 = vadd.f32 %v467, %v480
        %v485 = vld [vmem:[#allocation2 + $0x2] sm:$0xff]
        %v486 = vld [vmem:[#allocation2 + $0xa] sm:$0xff]
        %v487 = vperm.slane %v402, 0
        %v488 = vmul.f32 %v485, %v487
        %v489 = vmul.f32 %v486, %v487
        %v490 = vadd.f32 %v483, %v488
        %v491 = vadd.f32 %v484, %v489
        %v492 = vperm.slane %v402, 1
        %494 = vrot.lane.b32.xlu0 %v492, 4
        %v495 = vpop.permute.xlu0 %494
        %v497 = vmul.f32 %v485, %v495
        %v498 = vmul.f32 %v486, %v495
        %501 = vrot.lane.b32.xlu0 %v497, 124
        %v502 = vpop.permute.xlu0 %501
        %503 = vrot.lane.b32.xlu0 %v498, 124
        %v504 = vpop.permute.xlu0 %503
        %v507 = vadd.f32 %v490, %v502
        %v508 = vadd.f32 %v491, %v504
        %v509 = vperm.slane %v402, 2
        %511 = vrot.lane.b32.xlu0 %v509, 8
        %v512 = vpop.permute.xlu0 %511
        %v514 = vmul.f32 %v485, %v512
        %v515 = vmul.f32 %v486, %v512
        %518 = vrot.lane.b32.xlu0 %v514, 120
        %v519 = vpop.permute.xlu0 %518
        %520 = vrot.lane.b32.xlu0 %v515, 120
        %v521 = vpop.permute.xlu0 %520
        %v524 = vadd.f32 %v507, %v519
        %v525 = vadd.f32 %v508, %v521
        %v526 = vpack.c.bf16 %v525, %v524
        %v527 = vld [vmem:[#allocation9] sm:$0xf]
        %v528 = vld [vmem:[#allocation9 + $0x4] sm:$0xf]
        %v529 = vld [vmem:[#allocation9 + $0x8] sm:$0xf]
        %v530 = vld [vmem:[#allocation9 + $0xc] sm:$0xf]
        %v531 = vld [vmem:[#allocation9 + $0x10] sm:$0xf]
        %v532 = vld [vmem:[#allocation9 + $0x14] sm:$0xf]
        %v533 = vld [vmem:[#allocation9 + $0x18] sm:$0xf]
        %v534 = vld [vmem:[#allocation9 + $0x1c] sm:$0xf]
        %v543 = vunpack.c.l.b16 %v527
        %v544 = vunpack.c.l.b16 %v528
        %v545 = vunpack.c.l.b16 %v529
        %v546 = vunpack.c.l.b16 %v530
        %v547 = vunpack.c.l.b16 %v531
        %v548 = vunpack.c.l.b16 %v532
        %v549 = vunpack.c.l.b16 %v533
        %v550 = vunpack.c.l.b16 %v534
        %v551 = vpack.c.b16 %v544, %v543
        %v552 = vpack.c.b16 %v546, %v545
        %v553 = vpack.c.b16 %v548, %v547
        %v554 = vpack.c.b16 %v550, %v549
        %vm559 = vcmask 523264
        %v561 = vsel %vm559, %v526, 0
        %563 = vmatpush.bf16.msra.mxu0 0
        %564 = vmatpush.bf16.msra.mxu0 0
        %565 = vmatpush.bf16.msra.mxu0 0
        %566 = vmatpush.bf16.msra.mxu0 0
        %567 = vmatpush.bf16.msra.mxu0 %v554
        %568 = vmatpush.bf16.msra.mxu0 %v553
        %569 = vmatpush.bf16.msra.mxu0 %v552
        %570 = vmatpush.bf16.msra.mxu0 %v551
        %571 = vmatmul.bf16.gmra.mxu0 %v561
        %v572 = vpop.f32.mrf.mxu0
        %v573 = vadd.f32 0.0, %v572
        %v574 = vpop.f32.mrf.mxu0
        %v575 = vadd.f32 0.0, %v574
        %576 = vdwg.mxu0
        %577 = vst.msk [vmem:[%s350] sm:$0xff] %vm559, %v573
        %578 = vst.msk [vmem:[%s350 + $0x8] sm:$0xff] %vm559, %v575
        %v579 = vsel %vm559, %v573, 0.0
        %v580 = vsel %vm559, %v575, 0.0
        %v581 = vadd.f32 %v579, %v580
        %v582 = vrot.slane %v581, 4
        %v583 = vadd.f32 %v581, %v582
        %v584 = vrot.slane %v583, 2
        %v585 = vadd.f32 %v583, %v584
        %v586 = vrot.slane %v585, 1
        %v587 = vadd.f32 %v585, %v586
        %vm588 = vcmask 516096
        %589 = vst.msk [vmem:[%s356] sm:$0x1] %vm588, %v587
        %v590 = vmul.f32 %v573, %v573
        %v591 = vmul.f32 %v575, %v575
        %v592 = vsel %vm559, %v590, 0.0
        %v593 = vsel %vm559, %v591, 0.0
        %v594 = vadd.f32 %v592, %v593
        %v595 = vrot.slane %v594, 4
        %v596 = vadd.f32 %v594, %v595
        %v597 = vrot.slane %v596, 2
        %v598 = vadd.f32 %v596, %v597
        %v599 = vrot.slane %v598, 1
        %v600 = vadd.f32 %v598, %v599
        %601 = vst.msk [vmem:[%s362] sm:$0x1] %vm588, %v600
        %s602 = sand.u32 %s148, 1
        %s603 = scalar_lea.sflag [#allocation5], %s602
        %s604 = sand.u32 %s148, 1
        %s605 = smul.addr %s604, 16
        %s606 = scalar_lea.vmem [#allocation11], %s605
        %s607 = sand.u32 %s30, 1
        %s608 = scalar_lea.sflag [#allocation13], %s607
        %s609 = sand.u32 %s174, 1
        %s610 = scalar_lea.vmem [#allocation12], %s609
        %s611 = sand.u32 %s30, 1
        %s612 = scalar_lea.sflag [#allocation13], %s611
        %s613 = sand.u32 %s200, 1
        %s614 = scalar_lea.vmem [#allocation14], %s613
        // Predicated region
        $region57: #{tpu_custom_call.1} parent=39 // pred_check
          %p615 = pneg %p158
        $region58: #{tpu_custom_call.1} parent=39 // pred_check_branch
          %617 = sbr.rel (%p615) target = $region60
        $region59: #{tpu_custom_call.1} parent=39 // pred_region
          %619 = vsyncadd %s603, 0
          %s620 = smul.addr %s30, 2
          %s621 = smul.addr %s620, 8
          %s622 = scalar_lea.hbm %s5, %s621
          %s623 = sshll.u32 %s606, 4
          %s624 = int_to_ptr.vmem [resolvable:$true] %s623
          %s625 = sshll.u32 %s622, 4
          %s626 = int_to_ptr.hbm [resolvable:$true] %s625
          %631 = dma.vmem_to_hbm [thread:$0]  %s624, 256, %s626, %s603, 128, 128, 8
        $region60: #{tpu_custom_call.1} parent=39 // pred_fallthru
          _
        // Predicated region
        $region61: #{tpu_custom_call.1} parent=39 // pred_check
          %p632 = pneg %p184
        $region62: #{tpu_custom_call.1} parent=39 // pred_check_branch
          %634 = sbr.rel (%p632) target = $region64
        $region63: #{tpu_custom_call.1} parent=39 // pred_region
          %636 = vsyncadd %s608, 0
          %s637 = scalar_lea.hbm %s6, %s30
          %s639 = sshll.u32 %s610, 4
          %s640 = int_to_ptr.vmem [resolvable:$true] %s639
          %s641 = sshll.u32 %s637, 4
          %s642 = int_to_ptr.hbm [resolvable:$true] %s641
          %644 = dma.vmem_to_hbm [thread:$0]  %s640, 16, %s642, %s608
        $region64: #{tpu_custom_call.1} parent=39 // pred_fallthru
          _
        // Predicated region
        $region65: #{tpu_custom_call.1} parent=39 // pred_check
          %p645 = pneg %p210
        $region66: #{tpu_custom_call.1} parent=39 // pred_check_branch
          %647 = sbr.rel (%p645) target = $region68
        $region67: #{tpu_custom_call.1} parent=39 // pred_region
          %649 = vsyncadd %s612, 0
          %s650 = scalar_lea.hbm %s7, %s30
          %s652 = sshll.u32 %s614, 4
          %s653 = int_to_ptr.vmem [resolvable:$true] %s652
          %s654 = sshll.u32 %s650, 4
          %s655 = int_to_ptr.hbm [resolvable:$true] %s654
          %657 = dma.vmem_to_hbm [thread:$0]  %s653, 16, %s655, %s612
        $region68: #{tpu_custom_call.1} parent=39 // pred_fallthru
          _
      $region40: #{tpu_custom_call.1} parent=5 // pred_fallthru
        _
      %p658 = scmp.le.s32.totalorder 2, %s25
      // Predicated region
      $region69: #{tpu_custom_call.1} parent=5 // pred_check
        %p659 = pneg %p658
      $region70: #{tpu_custom_call.1} parent=5 // pred_check_branch
        %661 = sbr.rel (%p659) target = $region72
      $region71: #{tpu_custom_call.1} parent=5 // pred_region
        %s662 = ssub.s32 %s25, 2
        // Predicated region
        $region73: #{tpu_custom_call.1} parent=71 // pred_check
          %p663 = pneg %p164
        $region74: #{tpu_custom_call.1} parent=71 // pred_check_branch
          %665 = sbr.rel (%p663) target = $region76
        $region75: #{tpu_custom_call.1} parent=71 // pred_region
          %s666 = sand.u32 %s149, 1
          %s667 = scalar_lea.sflag [#allocation5], %s666
          %s668 = sand.u32 %s149, 1
          %s669 = smul.addr %s668, 16
          %s670 = scalar_lea.vmem [#allocation11], %s669
          %672 = dma.done %s667, 256
        $region76: #{tpu_custom_call.1} parent=71 // pred_fallthru
          _
        // Predicated region
        $region77: #{tpu_custom_call.1} parent=71 // pred_check
          %p673 = pneg %p190
        $region78: #{tpu_custom_call.1} parent=71 // pred_check_branch
          %675 = sbr.rel (%p673) target = $region80
        $region79: #{tpu_custom_call.1} parent=71 // pred_region
          %s676 = sand.u32 %s31, 1
          %s677 = scalar_lea.sflag [#allocation13], %s676
          %s678 = sand.u32 %s175, 1
          %s679 = scalar_lea.vmem [#allocation12], %s678
          %681 = dma.done %s677, 16
        $region80: #{tpu_custom_call.1} parent=71 // pred_fallthru
          _
        // Predicated region
        $region81: #{tpu_custom_call.1} parent=71 // pred_check
          %p682 = pneg %p216
        $region82: #{tpu_custom_call.1} parent=71 // pred_check_branch
          %684 = sbr.rel (%p682) target = $region84
        $region83: #{tpu_custom_call.1} parent=71 // pred_region
          %s685 = sand.u32 %s31, 1
          %s686 = scalar_lea.sflag [#allocation13], %s685
          %s687 = sand.u32 %s201, 1
          %s688 = scalar_lea.vmem [#allocation14], %s687
          %690 = dma.done %s686, 16
        $region84: #{tpu_custom_call.1} parent=71 // pred_fallthru
          _
      $region72: #{tpu_custom_call.1} parent=5 // pred_fallthru
        _
    $region6: #{tpu_custom_call.1} parent=1 // loop_footer
      %s29 = sadd.s32 1, %s25
    $region7: #{tpu_custom_call.1} parent=1 // loop_footer_branch
      %24 = sbr.rel target = $region3
    $region8: #{tpu_custom_call.1} parent=1 // loop_exit
      _
    %691 = vsyncpa [#allocation4], 1
    %s692 = scalar_lea.sflag [#allocation4], 1
    %693 = vsyncpa %s692, 1
    %694 = vsyncpa [#allocation7], 1
    %695 = vsyncpa [#allocation10], 1
    %696 = vsyncpa [#allocation5], 1
    %s697 = scalar_lea.sflag [#allocation5], 1
    %698 = vsyncpa %s697, 1
    %699 = vsyncpa [#allocation13], 1
    %s700 = scalar_lea.sflag [#allocation13], 1
    %701 = vsyncpa %s700, 1

</llo_original>
